<compile_context>
chip_gen: v7x
topology: tpu7x:2x2x1
jax: 0.10.0
libtpu: 0.0.40
codegen_flags: <defaults>
</compile_context>

<pallas_src>
import math

import jax
import jax.numpy as jnp
from jax.experimental import pallas as pl
from jax.experimental.pallas import tpu as pltpu


def _round_up(x, m):
    return ((x + m - 1) // m) * m


def _cdiv(a, b):
    return (a + b - 1) // b


def _vmem_capacity_bytes():
    """Physical per-TensorCore VMEM; conservative 64 MiB (v7x) fallback."""
    try:
        info = pltpu.get_tpu_info()
        cap = int(getattr(info, "vmem_capacity_bytes", 0) or 0)
        if cap > 0:
            return cap
    except Exception:
        pass
    return 64 * 1024 * 1024


def _choose_tk(k_pad, tk_cap):
    """Largest K tile (multiple of 128, <= tk_cap) minimising K over-padding
    and per-k-step accumulator read-modify-write / pipeline overhead."""
    if k_pad <= tk_cap:
        return k_pad                       # full K in one tile: no K grid axis
    best_tk, best_cost = 128, None
    for tk in range(tk_cap, 127, -128):
        k_stream = _round_up(k_pad, tk)    # streamed K columns incl. zero pad
        steps = k_stream // tk
        cost = k_stream + 64 * steps       # padding-bytes proxy + per-step cost
        if best_cost is None or cost < best_cost:
            best_tk, best_cost = tk, cost
    return best_tk


def _make_linear_kernel(has_bias, multi_k):
    def _dot(x, w):
        # Contract the last (K) axis of both operands on the MXU; the weight
        # stays in its natural (N, K) layout (no per-call transpose HBM pass,
        # no per-tile XLU transpose in the hot loop).
        return jax.lax.dot_general(
            x, w,
            dimension_numbers=(((1,), (1,)), ((), ())),
            preferred_element_type=jnp.float32,
        )

    if multi_k:
        def kernel(*refs):
            if has_bias:
                x_ref, w_ref, b_ref, o_ref, acc_ref = refs
            else:
                x_ref, w_ref, o_ref, acc_ref = refs
            k = pl.program_id(2)

            @pl.when(k == 0)
            def _():
                acc_ref[...] = jnp.zeros_like(acc_ref)

            acc_ref[...] += _dot(x_ref[...], w_ref[...])

            @pl.when(k == pl.num_programs(2) - 1)
            def _():
                r = acc_ref[...]
                if has_bias:
                    r = r + b_ref[...].astype(jnp.float32)
                o_ref[...] = r.astype(o_ref.dtype)
    else:
        # Full-K tile: single MXU pass per output tile, no scratch accumulator.
        def kernel(*refs):
            if has_bias:
                x_ref, w_ref, b_ref, o_ref = refs
            else:
                x_ref, w_ref, o_ref = refs
            r = _dot(x_ref[...], w_ref[...])
            if has_bias:
                r = r + b_ref[...].astype(jnp.float32)
            o_ref[...] = r.astype(o_ref.dtype)

    return kernel


def lazy_linear_pallas(x, weight, bias=None, *, tm=512, tn=512, tk=None,
                       compute_dtype=None, small_fallback=False):
    """F.linear semantics: out[..., n] = sum_k x[..., k] * weight[n, k] + bias[n].

    compute_dtype: optionally cast x/weight (e.g. jnp.bfloat16) for MXU peak;
                   accumulation stays f32, output keeps x.dtype.
    tk:            optional K-tile override (rounded to a multiple of 128).
    small_fallback: optional XLA fast path for tiny problems (off by default so
                   the Pallas kernel is always exercised).
    """
    orig_shape = x.shape
    K = orig_shape[-1]
    N = weight.shape[0]
    assert weight.shape == (N, K)
    out_dtype = x.dtype
    has_bias = bias is not None

    x2d = x.reshape(-1, K)
    M = x2d.shape[0]

    if compute_dtype is not None:
        x2d = x2d.astype(compute_dtype)
        weight = weight.astype(compute_dtype)

    # Optional tiny-problem fast path: launch/pipeline overhead dominates there.
    if small_fallback and (M * N * K) <= (128 * 128 * 512):
        out2d = jnp.dot(x2d.astype(jnp.float32), weight.astype(jnp.float32).T)
        if has_bias:
            out2d = out2d + bias.astype(jnp.float32)
        return out2d.astype(out_dtype).reshape(*orig_shape[:-1], N)

    in_dtype = x2d.dtype
    itemsize = jnp.dtype(in_dtype).itemsize
    out_itemsize = jnp.dtype(out_dtype).itemsize
    sublane = max(8, 32 // max(itemsize, 1))   # 8 rows f32, 16 bf16, 32 int8/fp8

    # ---- generation-aware VMEM budget --------------------------------------
    vmem_phys = _vmem_capacity_bytes()
    # Ask-limit ceiling: v7x (64 MiB/TC) keeps ~20% physical headroom; v5e/v6e
    # (128 MiB) are allowed well past the 32 MiB default scoped limit.
    vmem_ask_cap = min(int(0.80 * vmem_phys), 100 * 1024 * 1024)
    tile_budget = max(vmem_ask_cap - 12 * 1024 * 1024, 16 * 1024 * 1024)

    # ---- tile selection -----------------------------------------------------
    tm_eff = max(sublane, (min(tm, _round_up(M, sublane)) // sublane) * sublane)
    tn_eff = max(128, (min(tn, _round_up(N, 128)) // 128) * 128)

    # v7x megacore: make sure the parallel axes carry at least 2 blocks total.
    if _cdiv(M, tm_eff) * _cdiv(N, tn_eff) < 2:
        if tm_eff >= 256:
            tm_eff = _round_up(tm_eff // 2, sublane)
        elif tn_eff >= 256:
            tn_eff = max(128, ((tn_eff // 2) // 128) * 128)
        elif tm_eff >= 2 * sublane:
            tm_eff = _round_up(tm_eff // 2, sublane)

    grid_m = _cdiv(M, tm_eff)
    grid_n = _cdiv(N, tn_eff)

    # K tile: as large as the VMEM budget allows (ideally the full padded K),
    # chosen to minimise K over-padding.
    K_pad = _round_up(K, 128)
    fixed_bytes = (2 * tm_eff * tn_eff * out_itemsize      # double-buffered out
                   + tm_eff * tn_eff * 4                   # f32 accumulator
                   + (2 * tn_eff * itemsize if has_bias else 0))
    tk_cap = (tile_budget - fixed_bytes) // (2 * (tm_eff + tn_eff) * itemsize)
    tk_cap = max(128, (tk_cap // 128) * 128)
    if tk is not None:
        tk_eff = max(128, (int(tk) // 128) * 128)
    else:
        tk_eff = _choose_tk(K_pad, tk_cap)

    K_stream = _round_up(K_pad, tk_eff)
    grid_k = K_stream // tk_eff
    multi_k = grid_k > 1

    # ---- only K needs zero padding (exact for a linear layer).  Ragged M / N
    # tiles read garbage that only lands in output rows/cols outside (M, N),
    # and out-of-bounds output stores are dropped -- no wrapper-side copies.
    if K_stream != K:
        x_p = jnp.pad(x2d, ((0, 0), (0, K_stream - K)))
        w_p = jnp.pad(weight, ((0, 0), (0, K_stream - K)))
    else:
        x_p, w_p = x2d, weight

    kernel = _make_linear_kernel(has_bias, multi_k)

    if multi_k:
        grid = (grid_m, grid_n, grid_k)
        x_spec = pl.BlockSpec((tm_eff, tk_eff), lambda i, j, k: (i, k))
        w_spec = pl.BlockSpec((tn_eff, tk_eff), lambda i, j, k: (j, k))
        b_spec = pl.BlockSpec((1, tn_eff), lambda i, j, k: (0, j))
        o_spec = pl.BlockSpec((tm_eff, tn_eff), lambda i, j, k: (i, j))
        scratch = [pltpu.VMEM((tm_eff, tn_eff), jnp.float32)]
        semantics = ("parallel", "parallel", "arbitrary")
    else:
        grid = (grid_m, grid_n)
        x_spec = pl.BlockSpec((tm_eff, tk_eff), lambda i, j: (i, 0))
        w_spec = pl.BlockSpec((tn_eff, tk_eff), lambda i, j: (j, 0))
        b_spec = pl.BlockSpec((1, tn_eff), lambda i, j: (0, j))
        o_spec = pl.BlockSpec((tm_eff, tn_eff), lambda i, j: (i, j))
        scratch = []
        semantics = ("parallel", "parallel")

    in_specs = [x_spec, w_spec]
    inputs = [x_p, w_p]
    if has_bias:
        in_specs.append(b_spec)
        inputs.append(bias.reshape(1, N))

    # Actual VMEM footprint (inputs/outputs double-buffered by the pipeline,
    # accumulator single-buffered) + headroom for compiler-internal scratch.
    footprint = (2 * (tm_eff + tn_eff) * tk_eff * itemsize
                 + 2 * tm_eff * tn_eff * out_itemsize
                 + (tm_eff * tn_eff * 4 if multi_k else 0)
                 + (2 * tn_eff * itemsize if has_bias else 0))
    vmem_limit = int(min(max(footprint + 12 * 1024 * 1024, 32 * 1024 * 1024),
                         vmem_ask_cap))

    cost = pl.CostEstimate(
        flops=2 * M * N * K,
        transcendentals=0,
        bytes_accessed=int(
            (grid_m * tm_eff) * K_stream * grid_n * itemsize    # x re-streamed per N tile
            + (grid_n * tn_eff) * K_stream * grid_m * itemsize  # w re-streamed per M tile
            + M * N * out_itemsize                              # output written once
            + (N * itemsize if has_bias else 0)),
    )

    # TODO(synk): if profiling shows exposed DMA at k-step boundaries on
    # small-N/small-K shapes, set pipeline_mode=pl.Buffered(3) on x/w specs.
    out2d = pl.pallas_call(
        kernel,
        out_shape=jax.ShapeDtypeStruct((M, N), out_dtype),
        grid_spec=pltpu.PrefetchScalarGridSpec(
            num_scalar_prefetch=0,
            grid=grid,
            in_specs=in_specs,
            out_specs=o_spec,
            scratch_shapes=scratch,
        ),
        compiler_params=pltpu.CompilerParams(
            dimension_semantics=semantics,
            vmem_limit_bytes=vmem_limit,
        ),
        cost_estimate=cost,
    )(*inputs)

    return out2d.reshape(*orig_shape[:-1], N)


def init_lazy_linear_params(key, in_features, out_features, dtype=jnp.float32):
    """Deterministic init mirroring LazyLinear.reset_parameters():
    kaiming_uniform_(a=sqrt(5)) -> U(-1/sqrt(fan_in), 1/sqrt(fan_in)) for both
    weight and bias."""
    kw, kb = jax.random.split(key)
    fan_in = in_features
    gain = math.sqrt(2.0 / (1.0 + 5.0))            # kaiming_uniform with a=sqrt(5)
    bound_w = gain * math.sqrt(3.0 / fan_in)       # == 1/sqrt(fan_in)
    bound_b = 1.0 / math.sqrt(fan_in)
    weight = jax.random.uniform(kw, (out_features, in_features),
                                dtype=dtype, minval=-bound_w, maxval=bound_w)
    bias = jax.random.uniform(kb, (out_features,),
                              dtype=dtype, minval=-bound_b, maxval=bound_b)
    return weight, bias


if __name__ == "__main__":
    key = jax.random.PRNGKey(0)
    k_x, k_p, k_x2, k_p2 = jax.random.split(key, 4)

    # ---- small test at module-implied shapes (lazy in_features) ------------
    batch, seq, hidden = 2, 8, 32
    out_features = 64
    x = jax.random.normal(k_x, (batch, seq, hidden), dtype=jnp.float32)
    in_features = x.shape[-1]                      # lazy inference of in_features
    weight, bias = init_lazy_linear_params(k_p, in_features, out_features)

    out = jax.block_until_ready(lazy_linear_pallas(x, weight, bias))
    ref = jnp.einsum("bsk,nk->bsn", x, weight) + bias
    assert out.shape == (batch, seq, out_features)
    assert jnp.allclose(out, ref, atol=1e-5, rtol=1e-5)

    # no-bias kernel variant (LazyLinear(bias=False))
    out_nb = jax.block_until_ready(lazy_linear_pallas(x, weight, None))
    ref_nb = jnp.einsum("bsk,nk->bsn", x, weight)
    assert jnp.allclose(out_nb, ref_nb, atol=1e-5, rtol=1e-5)

    # ---- larger test: ragged M (300), full-K tile, megacore M split --------
    b2, s2, h2, n2 = 3, 100, 1280, 384
    x_big = jax.random.normal(k_x2, (b2, s2, h2), dtype=jnp.float32)
    w_big, bias_big = init_lazy_linear_params(k_p2, h2, n2)

    out_big = jax.block_until_ready(lazy_linear_pallas(x_big, w_big, bias_big))
    ref_big = jnp.einsum("bsk,nk->bsn", x_big, w_big) + bias_big
    assert out_big.shape == (b2, s2, n2)
    assert jnp.allclose(out_big, ref_big, atol=2e-3, rtol=2e-3)

    # force the multi-K (accumulator) path to exercise K tiling + K padding
    out_mk = jax.block_until_ready(
        lazy_linear_pallas(x_big, w_big, bias_big, tk=512))
    assert jnp.allclose(out_mk, ref_big, atol=2e-3, rtol=2e-3)

    # optional bf16 compute path (f32 accumulation, f32 output)
    out_bf16 = jax.block_until_ready(
        lazy_linear_pallas(x_big, w_big, bias_big, compute_dtype=jnp.bfloat16))
    assert out_bf16.dtype == x_big.dtype
    assert jnp.allclose(out_bf16, ref_big, atol=5e-2, rtol=5e-2)

    print("KERNEL_OK")
</pallas_src>

<mosaic_0001>
module attributes {stable_mosaic.version = 11 : i64} {
  func.func @kernel(%arg0: i32, %arg1: i32, %arg2: memref<8x128xf32, #tpu.memory_space<vmem>>, %arg3: memref<128x128xf32, #tpu.memory_space<vmem>>, %arg4: memref<1x128xf32, #tpu.memory_space<vmem>>, %arg5: memref<8x128xf32, #tpu.memory_space<vmem>>) attributes {dimension_semantics = [#tpu.dimension_semantics<parallel>, #tpu.dimension_semantics<parallel>], iteration_bounds = array<i64: 2, 1>, scalar_prefetch = 0 : i64, scratch_operands = 0 : i64, tpu.core_type = #tpu.core_type<tc>, window_params = [{transform_indices = @transform_0, window_bounds = array<i64: 8, 128>}, {transform_indices = @transform_1, window_bounds = array<i64: 128, 128>}, {transform_indices = @transform_2, window_bounds = array<i64: 1, 128>}, {transform_indices = @transform_3, window_bounds = array<i64: 8, 128>}]} {
    %c0 = arith.constant 0 : index
    %c0_0 = arith.constant 0 : index
    %0 = vector.load %arg2[%c0, %c0_0] : memref<8x128xf32, #tpu.memory_space<vmem>>, vector<8x128xf32>
    %c0_1 = arith.constant 0 : index
    %c0_2 = arith.constant 0 : index
    %1 = vector.load %arg3[%c0_1, %c0_2] : memref<128x128xf32, #tpu.memory_space<vmem>>, vector<128x128xf32>
    %cst = arith.constant dense<0.000000e+00> : vector<8x128xf32>
    %2 = tpu.matmul %0, %1, %cst {dimension_numbers = #tpu.dot_dimension_numbers<[1], [1], [0], [0], [0, 0, 1, 0], [], []>} : vector<8x128xf32>, vector<128x128xf32>, vector<8x128xf32> -> vector<8x128xf32>
    %c0_3 = arith.constant 0 : index
    %c0_4 = arith.constant 0 : index
    %3 = vector.load %arg4[%c0_3, %c0_4] : memref<1x128xf32, #tpu.memory_space<vmem>>, vector<1x128xf32>
    %4 = vector.broadcast %3 : vector<1x128xf32> to vector<8x128xf32>
    %5 = arith.addf %2, %4 : vector<8x128xf32>
    %c0_5 = arith.constant 0 : index
    %c0_6 = arith.constant 0 : index
    %6 = vector.load %arg5[%c0_5, %c0_6] : memref<8x128xf32, #tpu.memory_space<vmem>>, vector<8x128xf32>
    tpu.vector_store %arg5[%c0_5, %c0_6], %5 {strides = array<i32>} : memref<8x128xf32, #tpu.memory_space<vmem>>, vector<8x128xf32>,
    return
  }
  func.func @transform_0(%arg0: i32, %arg1: i32) -> (i32, i32) {
    %c0_i32 = arith.constant 0 : i32
    %c0_i32_0 = arith.constant 0 : i32
    return %arg0, %c0_i32 : i32, i32
  }
  func.func @transform_1(%arg0: i32, %arg1: i32) -> (i32, i32) {
    %c0_i32 = arith.constant 0 : i32
    %c0_i32_0 = arith.constant 0 : i32
    return %arg1, %c0_i32 : i32, i32
  }
  func.func @transform_2(%arg0: i32, %arg1: i32) -> (i32, i32) {
    %c0_i32 = arith.constant 0 : i32
    %c0_i32_0 = arith.constant 0 : i32
    return %c0_i32, %arg1 : i32, i32
  }
  func.func @transform_3(%arg0: i32, %arg1: i32) -> (i32, i32) {
    %c0_i32 = arith.constant 0 : i32
    return %arg0, %arg1 : i32, i32
  }
}

</mosaic_0001>

<llo_original>
// kernel: tpu_custom_call.1
$region0: #{tpu_custom_call.1}
  #allocation0 [shape = 'u32[]', space=smem, size = 0x4, offset = 0x4, fixed_abs, tag = 'smem constant byte address 0x4 - core index']
  #allocation1 [shape = 'u32[144,128]{1,0:T(1,128)}', space=vmem, size = 0x12000, scoped, tag = 'internal scratch']
  %s0 = inlined_call_operand.hbm [shape: f32[16,128], index: 0, kind: input, shape index: {}]
  %s1 = inlined_call_operand.hbm [shape: f32[64,128], index: 1, kind: input, shape index: {}]
  %s2 = inlined_call_operand.vmem [shape: f32[1,64], index: 2, kind: input, shape index: {}]
  %s3 = inlined_call_operand.hbm [shape: f32[16,64], index: 3, kind: output, shape index: {}]
  %s4 = sld [smem:[#allocation0]]
  $region53: #{tpu_custom_call.1} parent=0
    _
  %s6 = ssub.s32 1, %s4
  %s7 = scalar_select 0, %s6, %s4
  $region1: #{tpu_custom_call.1} parent=0
    #allocation2 [shape = 'u8[8192]{0}', space=vmem, size = 0x2000, scoped, tag = 'input window, operand 0']
    #allocation3 [shape = 's32[2]{0}', space=sflag, size = 0x8, scoped, tag = 'scoped memory for tpu_custom_call.1']
    #allocation4 [shape = 's32[2]{0}', space=sflag, size = 0x8, scoped, tag = 'scoped memory for tpu_custom_call.1']
    #allocation5 [shape = 'u8[65536]{0}', space=vmem, size = 0x10000, scoped, tag = 'input window, operand 1, single buffered']
    #allocation6 [shape = 's32[1]{0}', space=sflag, size = 0x4, scoped, tag = 'scoped memory for tpu_custom_call.1']
    #allocation7 [shape = 'u8[8192]{0}', space=vmem, size = 0x2000, scoped, tag = 'output window, operand 0']
    %8 = vsyncpa [#allocation3], 0
    %s9 = scalar_lea.sflag [#allocation3], 1
    %10 = vsyncpa %s9, 0
    %11 = vsyncpa [#allocation6], 0
    %12 = vsyncpa [#allocation4], 0
    %s13 = scalar_lea.sflag [#allocation4], 1
    %14 = vsyncpa %s13, 0
    loop: start=0, step=1, limit=4
    $region2: #{tpu_custom_call.1} parent=1 // loop_pre_header
      _
    $region3: #{tpu_custom_call.1} parent=1 // loop_header
      %s16 = sphi 0, %s20
      %p17 = scmp.ge.s32.totalorder %s16, 4
      %s23 = sphi 0, %s35
      %s24 = sphi 0, %s31
      %s25 = sphi 0, %s23
      %s26 = sphi 0, %s24
      %s27 = sphi 0, %s25
      %s28 = sphi 0, %s26
      %s38 = sphi 0, %s40
      %s41 = sphi 0, %s38
      %s42 = sphi 0, %s41
      %s58 = sphi 0, %s42
      %s64 = sphi 0, %s66
      %s67 = sphi 0, %s64
      %s68 = sphi 0, %s67
      %s84 = sphi 0, %s68
      %s90 = sphi 0, %s92
      %s93 = sphi 0, %s90
      %s94 = sphi 0, %s93
      %s110 = sphi 0, %s94
      %s118 = sphi 0, %s120
      %s121 = sphi 0, %s118
      %s122 = sphi 0, %s121
      %s138 = sphi 0, %s122
    $region4: #{tpu_custom_call.1} parent=1 // loop_header_branch
      %19 = sbr.rel (%p17) target = $region8
    $region5: #{tpu_custom_call.1} parent=1 // loop_body
      %s21 = ssub.s32 %s16, 1
      %s22 = ssub.s32 %s16, 2
      %s29 = sadd.s32 1, %s24
      %p30 = scmp.ge.s32.totalorder %s29, 1
      %s31 = scalar_select %p30, 0, %s29
      %s32 = sadd.s32 1, %s23
      %s33 = scalar_select %p30, %s32, %s23
      %p34 = scmp.ge.s32.totalorder %s33, 2
      %s35 = scalar_select %p34, 0, %s33
      %s36 = ssub.s32 %s23, %s35
      %p37 = scmp.eq.s32.totalorder %s36, 0
      %s39 = sadd.s32 %s38, 1
      %s40 = scalar_select %p37, %s38, %s39
      %p43 = pneg %p37
      %p44 = scmp.eq.s32.totalorder %s16, 1
      %p45 = por %p43, %p44
      %p46 = scmp.ne.s32.totalorder %s38, %s41
      %p47 = scmp.eq.s32.totalorder %s16, 0
      %p48 = por %p46, %p47
      %p49 = scmp.ne.s32.totalorder %s38, %s41
      %p50 = scmp.eq.s32.totalorder %s21, 1
      %p51 = por %p49, %p50
      %p52 = scmp.ne.s32.totalorder %s41, %s42
      %p53 = scmp.eq.s32.totalorder %s21, 0
      %p54 = por %p52, %p53
      %p55 = scmp.ne.s32.totalorder %s41, %s42
      %p56 = scmp.eq.s32.totalorder %s22, 1
      %p57 = por %p55, %p56
      %p59 = scmp.ne.s32.totalorder %s42, %s58
      %p60 = scmp.eq.s32.totalorder %s22, 0
      %p61 = por %p59, %p60
      %s62 = ssub.s32 %s24, %s31
      %p63 = scmp.eq.s32.totalorder %s62, 0
      %s65 = sadd.s32 %s64, 1
      %s66 = scalar_select %p63, %s64, %s65
      %p69 = pneg %p63
      %p70 = scmp.eq.s32.totalorder %s16, 1
      %p71 = por %p69, %p70
      %p72 = scmp.ne.s32.totalorder %s64, %s67
      %p73 = scmp.eq.s32.totalorder %s16, 0
      %p74 = por %p72, %p73
      %p75 = scmp.ne.s32.totalorder %s64, %s67
      %p76 = scmp.eq.s32.totalorder %s21, 1
      %p77 = por %p75, %p76
      %p78 = scmp.ne.s32.totalorder %s67, %s68
      %p79 = scmp.eq.s32.totalorder %s21, 0
      %p80 = por %p78, %p79
      %p81 = scmp.ne.s32.totalorder %s67, %s68
      %p82 = scmp.eq.s32.totalorder %s22, 1
      %p83 = por %p81, %p82
      %p85 = scmp.ne.s32.totalorder %s68, %s84
      %p86 = scmp.eq.s32.totalorder %s22, 0
      %p87 = por %p85, %p86
      %s88 = ssub.s32 %s24, %s31
      %p89 = scmp.eq.s32.totalorder %s88, 0
      %s91 = sadd.s32 %s90, 1
      %s92 = scalar_select %p89, %s90, %s91
      %p95 = pneg %p89
      %p96 = scmp.eq.s32.totalorder %s16, 1
      %p97 = por %p95, %p96
      %p98 = scmp.ne.s32.totalorder %s90, %s93
      %p99 = scmp.eq.s32.totalorder %s16, 0
      %p100 = por %p98, %p99
      %p101 = scmp.ne.s32.totalorder %s90, %s93
      %p102 = scmp.eq.s32.totalorder %s21, 1
      %p103 = por %p101, %p102
      %p104 = scmp.ne.s32.totalorder %s93, %s94
      %p105 = scmp.eq.s32.totalorder %s21, 0
      %p106 = por %p104, %p105
      %p107 = scmp.ne.s32.totalorder %s93, %s94
      %p108 = scmp.eq.s32.totalorder %s22, 1
      %p109 = por %p107, %p108
      %p111 = scmp.ne.s32.totalorder %s94, %s110
      %p112 = scmp.eq.s32.totalorder %s22, 0
      %p113 = por %p111, %p112
      %s114 = ssub.s32 %s23, %s35
      %s115 = ssub.s32 %s24, %s31
      %s116 = sor.u32 %s114, %s115
      %p117 = scmp.eq.s32.totalorder %s116, 0
      %s119 = sadd.s32 %s118, 1
      %s120 = scalar_select %p117, %s118, %s119
      %p123 = pneg %p117
      %p124 = scmp.eq.s32.totalorder %s16, 1
      %p125 = por %p123, %p124
      %p126 = scmp.ne.s32.totalorder %s118, %s121
      %p127 = scmp.eq.s32.totalorder %s16, 0
      %p128 = por %p126, %p127
      %p129 = scmp.ne.s32.totalorder %s118, %s121
      %p130 = scmp.eq.s32.totalorder %s21, 1
      %p131 = por %p129, %p130
      %p132 = scmp.ne.s32.totalorder %s121, %s122
      %p133 = scmp.eq.s32.totalorder %s21, 0
      %p134 = por %p132, %p133
      %p135 = scmp.ne.s32.totalorder %s121, %s122
      %p136 = scmp.eq.s32.totalorder %s22, 1
      %p137 = por %p135, %p136
      %p139 = scmp.ne.s32.totalorder %s122, %s138
      %p140 = scmp.eq.s32.totalorder %s22, 0
      %p141 = por %p139, %p140
      %p142 = scmp.le.s32.totalorder 1, %s16
      %p143 = scmp.lt.s32.totalorder %s16, 3
      %p144 = pnand %p142, %p143
      %p145 = pneg %p144
      // Predicated region
      $region9: #{tpu_custom_call.1} parent=5 // pred_check
        _
      $region10: #{tpu_custom_call.1} parent=5 // pred_check_branch
        %147 = sbr.rel (%p144) target = $region12
      $region11: #{tpu_custom_call.1} parent=5 // pred_region
        %s148 = ssub.s32 %s16, 1
        // Predicated region
        $region13: #{tpu_custom_call.1} parent=11 // pred_check
          %p149 = pneg %p80
        $region14: #{tpu_custom_call.1} parent=11 // pred_check_branch
          %151 = sbr.rel (%p149) target = $region16
        $region15: #{tpu_custom_call.1} parent=11 // pred_region
          %s152 = smul.u32 16, %s26
          %s153 = ssub.s32 8, %s152
          %s154 = smul.u32 128, %s153
          %s156 = ssub.s32 2048, %s154
          %157 = vsyncadd [#allocation6], %s156
          %p158 = scmp.ne.s32.totalorder 0, %s154
          %s159 = smul.addr %s152, 128
          %s160 = scalar_lea.hbm %s1, %s159
          %s161 = smul.u32 8, %s153
          %s162 = sshll.u32 [#allocation5], 4
          %s163 = int_to_ptr.vmem [resolvable:$true] %s162
          %s164 = sshll.u32 %s161, 4
          %168 = dma.hbm_to_vmem [thread:$0]  (%p158), %s160, %s164, %s163, [#allocation6], 128, 128, 8
        $region16: #{tpu_custom_call.1} parent=11 // pred_fallthru
          _
        // Predicated region
        $region17: #{tpu_custom_call.1} parent=11 // pred_check
          %p169 = pneg %p106
        $region18: #{tpu_custom_call.1} parent=11 // pred_check_branch
          %171 = sbr.rel (%p169) target = $region20
        $region19: #{tpu_custom_call.1} parent=11 // pred_region
          %p172 = scmp.lt.s32.totalorder %s26, 0
          %s173 = scalar_select %p172, %s26, 0
          %s174 = scalar_lea.vmem %s2, %s173
        $region20: #{tpu_custom_call.1} parent=11 // pred_fallthru
          _
      $region12: #{tpu_custom_call.1} parent=5 // pred_fallthru
        _
      %p175 = scmp.lt.s32.totalorder %s16, 2
      // Predicated region
      $region21: #{tpu_custom_call.1} parent=5 // pred_check
        %p176 = pneg %p175
      $region22: #{tpu_custom_call.1} parent=5 // pred_check_branch
        %178 = sbr.rel (%p176) target = $region24
      $region23: #{tpu_custom_call.1} parent=5 // pred_region
        // Predicated region
        $region25: #{tpu_custom_call.1} parent=23 // pred_check
          %p179 = pneg %p48
        $region26: #{tpu_custom_call.1} parent=23 // pred_check_branch
          %181 = sbr.rel (%p179) target = $region28
        $region27: #{tpu_custom_call.1} parent=23 // pred_region
          %s182 = sand.u32 %s38, 1
          %s183 = scalar_lea.sflag [#allocation3], %s182
          %s184 = sand.u32 %s38, 1
          %s185 = smul.addr %s184, 8
          %s186 = scalar_lea.vmem [#allocation2], %s185
          %s188 = ssub.s32 128, 128
          %189 = vsyncadd %s183, %s188
          %s190 = smul.addr %s23, 128
          %s191 = scalar_lea.hbm %s0, %s190
          %s193 = sshll.u32 %s186, 4
          %s194 = int_to_ptr.vmem [resolvable:$true] %s193
          %196 = dma.hbm_to_vmem [thread:$0]  %s191, 128, %s194, %s183
        $region28: #{tpu_custom_call.1} parent=23 // pred_fallthru
          _
      $region24: #{tpu_custom_call.1} parent=5 // pred_fallthru
        _
      %p197 = scmp.le.s32.totalorder 1, %s16
      %p198 = scmp.lt.s32.totalorder %s16, 3
      %p199 = pnand %p197, %p198
      %p200 = pneg %p199
      // Predicated region
      $region29: #{tpu_custom_call.1} parent=5 // pred_check
        _
      $region30: #{tpu_custom_call.1} parent=5 // pred_check_branch
        %202 = sbr.rel (%p199) target = $region32
      $region31: #{tpu_custom_call.1} parent=5 // pred_region
        %s203 = ssub.s32 %s16, 1
        %s204 = sand.u32 %s41, 1
        %s205 = scalar_lea.sflag [#allocation3], %s204
        %s206 = sand.u32 %s41, 1
        %s207 = smul.addr %s206, 8
        %s208 = scalar_lea.vmem [#allocation2], %s207
        // Predicated region
        $region33: #{tpu_custom_call.1} parent=31 // pred_check
          %p209 = pneg %p54
        $region34: #{tpu_custom_call.1} parent=31 // pred_check_branch
          %211 = sbr.rel (%p209) target = $region36
        $region35: #{tpu_custom_call.1} parent=31 // pred_region
          %212 = dma.done %s205, 128
        $region36: #{tpu_custom_call.1} parent=31 // pred_fallthru
          _
        // Predicated region
        $region37: #{tpu_custom_call.1} parent=31 // pred_check
          %p213 = pneg %p80
        $region38: #{tpu_custom_call.1} parent=31 // pred_check_branch
          %215 = sbr.rel (%p213) target = $region40
        $region39: #{tpu_custom_call.1} parent=31 // pred_region
          %216 = dma.done [#allocation6], 2048
        $region40: #{tpu_custom_call.1} parent=31 // pred_fallthru
          _
        %s217 = sand.u32 %s41, 1
        %s218 = scalar_lea.sflag [#allocation3], %s217
        %s219 = sand.u32 %s41, 1
        %s220 = smul.addr %s219, 8
        %s221 = scalar_lea.vmem [#allocation2], %s220
        %p222 = pneg %p54
        %p223 = pneg %p51
        %p224 = pneg %p80
        %p225 = pneg %p77
        %p226 = scmp.lt.s32.totalorder %s26, 0
        %s227 = scalar_select %p226, %s26, 0
        %s228 = scalar_lea.vmem %s2, %s227
        %p229 = pneg %p106
        %p230 = pneg %p103
        %p231 = pneg %p134
        %p232 = pneg %p131
        %s233 = sand.u32 %s121, 1
        %s234 = scalar_lea.sflag [#allocation4], %s233
        %s235 = sand.u32 %s121, 1
        %s236 = smul.addr %s235, 8
        %s237 = scalar_lea.vmem [#allocation7], %s236
        %s238 = smul.u32 16, %s26
        %s239 = ssub.s32 8, %s238
        %s240 = smul.u32 128, %s239
        %p241 = scmp.lt.s32.totalorder %s26, 0
        %s242 = scalar_select %p241, %s26, 0
        %s243 = scalar_lea.vmem %s2, %s242
        %v244 = vld [vmem:[%s208] sm:$0xff]
        %v245 = vld [vmem:[#allocation5] sm:$0xff]
        %v246 = vld [vmem:[#allocation5 + $0x8] sm:$0xff]
        %v247 = vld [vmem:[#allocation5 + $0x10] sm:$0xff]
        %v248 = vld [vmem:[#allocation5 + $0x18] sm:$0xff]
        %v249 = vld [vmem:[#allocation5 + $0x20] sm:$0xff]
        %v250 = vld [vmem:[#allocation5 + $0x28] sm:$0xff]
        %v251 = vld [vmem:[#allocation5 + $0x30] sm:$0xff]
        %v252 = vld [vmem:[#allocation5 + $0x38] sm:$0xff]
        %v253 = vld [vmem:[#allocation5 + $0x40] sm:$0xff]
        %v254 = vld [vmem:[#allocation5 + $0x48] sm:$0xff]
        %v255 = vld [vmem:[#allocation5 + $0x50] sm:$0xff]
        %v256 = vld [vmem:[#allocation5 + $0x58] sm:$0xff]
        %v257 = vld [vmem:[#allocation5 + $0x60] sm:$0xff]
        %v258 = vld [vmem:[#allocation5 + $0x68] sm:$0xff]
        %v259 = vld [vmem:[#allocation5 + $0x70] sm:$0xff]
        %v260 = vld [vmem:[#allocation5 + $0x78] sm:$0xff]
        %v261 = vld [vmem:[%s243] sm:$0x1]
        %v263 = vlaneseq
        %v264 = vshrl.u32 %v263, 7
        %v265 = vsub.s32 0, %v264
        %v266 = vrot.slane %v261, %v265
        %268 = vmatprep.subr.mxu0 0.0
        %269 = vmatpush1.xpose.msra.mxu0 %v245
        %270 = vmatprep.subr.mxu0 0.0
        %271 = vmatpush1.xpose.msra.mxu0 %v246
        %272 = vmatprep.subr.mxu0 0.0
        %273 = vmatpush1.xpose.msra.mxu0 %v247
        %274 = vmatprep.subr.mxu0 0.0
        %275 = vmatpush1.xpose.msra.mxu0 %v248
        %276 = vmatprep.subr.mxu0 0.0
        %277 = vmatpush1.xpose.msra.mxu0 %v249
        %278 = vmatprep.subr.mxu0 0.0
        %279 = vmatpush1.xpose.msra.mxu0 %v250
        %280 = vmatprep.subr.mxu0 0.0
        %281 = vmatpush1.xpose.msra.mxu0 %v251
        %282 = vmatprep.subr.mxu0 0.0
        %283 = vmatpush1.xpose.msra.mxu0 %v252
        %284 = vmatprep.subr.mxu0 0.0
        %285 = vmatpush1.xpose.msra.mxu0 %v253
        %286 = vmatprep.subr.mxu0 0.0
        %287 = vmatpush1.xpose.msra.mxu0 %v254
        %288 = vmatprep.subr.mxu0 0.0
        %289 = vmatpush1.xpose.msra.mxu0 %v255
        %290 = vmatprep.subr.mxu0 0.0
        %291 = vmatpush1.xpose.msra.mxu0 %v256
        %292 = vmatprep.subr.mxu0 0.0
        %293 = vmatpush1.xpose.msra.mxu0 %v257
        %294 = vmatprep.subr.mxu0 0.0
        %295 = vmatpush1.xpose.msra.mxu0 %v258
        %296 = vmatprep.subr.mxu0 0.0
        %297 = vmatpush1.xpose.msra.mxu0 %v259
        %298 = vmatprep.subr.mxu0 0.0
        %299 = vmatpush1.xpose.msra.mxu0 %v260
        %300 = vmatprep.subr.mxu0 0.0
        %301 = vmatpush1.xpose.msra.mxu0 0.0
        %302 = vmatprep.subr.mxu0 0.0
        %303 = vmatpush1.xpose.msra.mxu0 0.0
        %304 = vmatprep.subr.mxu0 0.0
        %305 = vmatpush1.xpose.msra.mxu0 0.0
        %306 = vmatprep.subr.mxu0 0.0
        %307 = vmatpush1.xpose.msra.mxu0 0.0
        %308 = vmatprep.subr.mxu0 0.0
        %309 = vmatpush1.xpose.msra.mxu0 0.0
        %310 = vmatprep.subr.mxu0 0.0
        %311 = vmatpush1.xpose.msra.mxu0 0.0
        %312 = vmatprep.subr.mxu0 0.0
        %313 = vmatpush1.xpose.msra.mxu0 0.0
        %314 = vmatprep.subr.mxu0 0.0
        %315 = vmatpush1.xpose.msra.mxu0 0.0
        %316 = vmatprep.subr.mxu0 0.0
        %317 = vmatpush1.xpose.msra.mxu0 0.0
        %318 = vmatprep.subr.mxu0 0.0
        %319 = vmatpush1.xpose.msra.mxu0 0.0
        %320 = vmatprep.subr.mxu0 0.0
        %321 = vmatpush1.xpose.msra.mxu0 0.0
        %322 = vmatprep.subr.mxu0 0.0
        %323 = vmatpush1.xpose.msra.mxu0 0.0
        %324 = vmatprep.subr.mxu0 0.0
        %325 = vmatpush1.xpose.msra.mxu0 0.0
        %326 = vmatprep.subr.mxu0 0.0
        %327 = vmatpush1.xpose.msra.mxu0 0.0
        %328 = vmatprep.subr.mxu0 0.0
        %329 = vmatpush1.xpose.msra.mxu0 0.0
        %330 = vmatprep.subr.mxu0 0.0
        %331 = vmatpush1.xpose.msra.mxu0 0.0
        %332 = vmatprep.mubr.f32.mxu0 0.0
        %333 = vmatmul.mubr.f32.gmra.mrb[0].mxu0 %v244
        %v334 = vpop.f32.mrb[0].mxu0
        %v335 = vadd.f32 %v266, %v334
        %v336 = vpop.f32.mrb[0].mxu0
        %337 = vdwg.mxu0
        %338 = vst [vmem:[%s237] sm:$0xff] %v335
        %s339 = sand.u32 %s121, 1
        %s340 = scalar_lea.sflag [#allocation4], %s339
        %s341 = sand.u32 %s121, 1
        %s342 = smul.addr %s341, 8
        %s343 = scalar_lea.vmem [#allocation7], %s342
        // Predicated region
        $region41: #{tpu_custom_call.1} parent=31 // pred_check
          %p344 = pneg %p131
        $region42: #{tpu_custom_call.1} parent=31 // pred_check_branch
          %346 = sbr.rel (%p344) target = $region44
        $region43: #{tpu_custom_call.1} parent=31 // pred_region
          %s348 = ssub.s32 128, 128
          %349 = vsyncadd %s340, %s348
          %s350 = sadd.s32 %s26, %s25
          %s351 = smul.addr %s350, 128
          %s352 = scalar_lea.hbm %s3, %s351
          %s354 = sshll.u32 %s343, 4
          %s355 = int_to_ptr.vmem [resolvable:$true] %s354
          %357 = dma.vmem_to_hbm [thread:$0]  %s355, 128, %s352, %s340
        $region44: #{tpu_custom_call.1} parent=31 // pred_fallthru
          _
      $region32: #{tpu_custom_call.1} parent=5 // pred_fallthru
        _
      %p358 = scmp.le.s32.totalorder 2, %s16
      // Predicated region
      $region45: #{tpu_custom_call.1} parent=5 // pred_check
        %p359 = pneg %p358
      $region46: #{tpu_custom_call.1} parent=5 // pred_check_branch
        %361 = sbr.rel (%p359) target = $region48
      $region47: #{tpu_custom_call.1} parent=5 // pred_region
        %s362 = ssub.s32 %s16, 2
        // Predicated region
        $region49: #{tpu_custom_call.1} parent=47 // pred_check
          %p363 = pneg %p137
        $region50: #{tpu_custom_call.1} parent=47 // pred_check_branch
          %365 = sbr.rel (%p363) target = $region52
        $region51: #{tpu_custom_call.1} parent=47 // pred_region
          %s366 = sand.u32 %s122, 1
          %s367 = scalar_lea.sflag [#allocation4], %s366
          %s368 = sand.u32 %s122, 1
          %s369 = smul.addr %s368, 8
          %s370 = scalar_lea.vmem [#allocation7], %s369
          %371 = dma.done %s367, 128
        $region52: #{tpu_custom_call.1} parent=47 // pred_fallthru
          _
      $region48: #{tpu_custom_call.1} parent=5 // pred_fallthru
        _
    $region6: #{tpu_custom_call.1} parent=1 // loop_footer
      %s20 = sadd.s32 1, %s16
    $region7: #{tpu_custom_call.1} parent=1 // loop_footer_branch
      %15 = sbr.rel target = $region3
    $region8: #{tpu_custom_call.1} parent=1 // loop_exit
      _
    %372 = vsyncpa [#allocation3], 1
    %s373 = scalar_lea.sflag [#allocation3], 1
    %374 = vsyncpa %s373, 1
    %375 = vsyncpa [#allocation6], 1
    %376 = vsyncpa [#allocation4], 1
    %s377 = scalar_lea.sflag [#allocation4], 1
    %378 = vsyncpa %s377, 1

</llo_original>
